<compile_context>
chip_gen: v5e
topology: v5e:2x2
jax: 0.10.0
libtpu: 0.0.40
codegen_flags: <defaults>
</compile_context>

<pallas_src>
import math

import jax
import jax.numpy as jnp
from jax.experimental import pallas as pl
from jax.experimental.pallas import tpu as pltpu


_MAX_STATIC_UNROLL = 16   # fully unroll the S-chunk loop up to this many chunks


def _round_up(x, m):
    return ((x + m - 1) // m) * m


def _ceil_div(a, b):
    return -(-a // b)


def _device_kind():
    return jax.devices()[0].device_kind.lower()


# ----------------------------------------------------------------------------
# Kernel
# ----------------------------------------------------------------------------
def _make_kernel(s_chunk, n_chunks, mul_dtype):
    """Fused, S-chunked co-attention body for one (TB, Sp, Lp) batch block."""

    def kernel(z1_ref, t_ref, o_ref):
        # z1_ref: (TB, Lp) in mul_dtype; t_ref: (TB, Sp, Lp); o_ref: (TB, Lp)
        tb, lp = z1_ref.shape

        # Hoisted sublane broadcast of z1 to chunk shape.  JAX does not CSE
        # broadcast_in_dim, so doing this inside the loop would re-broadcast
        # once per chunk.
        zb = jnp.broadcast_to(z1_ref[...][:, None, :], (tb, s_chunk, lp))

        def chunk_update(ht, t_chunk):
            # t_chunk: (TB, s_chunk, Lp) — read once, used for BOTH contractions.
            tm = t_chunk.astype(mul_dtype)   # no-op unless bf16 T on a v5 chip
            # z2[b, s] = sum_l z1[b, l] * T[b, s, l]
            #   VPU multiply (bf16-packed when mul_dtype is bf16) + lane reduce,
            #   accumulated in f32 (one cross-lane XLU reduce per output tile).
            z2 = jnp.sum(zb * tm, axis=-1, dtype=jnp.float32)          # (TB, CH)
            c = jnp.tanh(z2)                                           # EUP, f32
            cm = c.astype(mul_dtype)
            # HT[b, l] += sum_s C[b, s] * T[b, s, l]
            #   VPU multiply + sublane reduce, f32 accumulation.
            return ht + jnp.sum(cm[:, :, None] * tm, axis=1, dtype=jnp.float32)

        ht = jnp.zeros((tb, lp), jnp.float32)

        if n_chunks <= _MAX_STATIC_UNROLL:
            # Fully unrolled with static sublane slices.
            for ci in range(n_chunks):
                ht = chunk_update(ht, t_ref[:, ci * s_chunk:(ci + 1) * s_chunk, :])
        else:
            def body(ci, carry):
                s0 = pl.multiple_of(ci * s_chunk, s_chunk)
                return chunk_update(carry, t_ref[:, pl.ds(s0, s_chunk), :])
            ht = jax.lax.fori_loop(0, n_chunks, body, ht, unroll=4)

        o_ref[...] = ht.astype(o_ref.dtype)

    return kernel


# ----------------------------------------------------------------------------
# Tiling / VMEM planning
# ----------------------------------------------------------------------------
def _vmem_bytes_per_batch_row(Sp, Lp, t_itemsize, mul_itemsize, out_itemsize, s_chunk):
    """Honest per-batch-row VMEM estimate (real dtypes, explicit temporaries)."""
    return (
        2 * Sp * Lp * t_itemsize        # T tile, double-buffered, real dtype
        + 2 * Lp * mul_itemsize         # z1 tile, double-buffered
        + 2 * Lp * out_itemsize         # output tile, double-buffered
        + 4 * s_chunk * Lp * 4          # in-kernel chunk temporaries (f32, bounded)
        + 4 * Lp * 4                    # ht accumulator + small per-row values
    )


def _choose_tb(B, per_row, vmem_budget, is_v7x):
    Bp8 = _round_up(B, 8)
    tb = (vmem_budget - (2 << 20)) // max(per_row, 1)
    tb = int(max(8, min(tb, 1024)))     # cap lifted from 256 to 1024
    tb -= tb % 8
    tb = min(tb, Bp8)
    if is_v7x and Bp8 >= 16:
        # Keep both TensorCores busy: at least 2 batch blocks on v7x.
        tb = min(tb, max(8, (Bp8 // 2) // 8 * 8))
    return max(tb, 8)


def _build_call(kernel, TB, Sp, Lp, nblocks, out_dtype, vmem_limit):
    return pl.pallas_call(
        kernel,
        out_shape=jax.ShapeDtypeStruct((nblocks * TB, Lp), out_dtype),
        grid_spec=pltpu.PrefetchScalarGridSpec(
            num_scalar_prefetch=0,
            grid=(nblocks,),
            in_specs=[
                pl.BlockSpec((TB, Lp), lambda b: (b, 0)),          # z1 block
                pl.BlockSpec((TB, Sp, Lp), lambda b: (b, 0, 0)),   # T block
            ],
            out_specs=pl.BlockSpec((TB, Lp), lambda b: (b, 0)),    # lane-dense out
        ),
        compiler_params=pltpu.CompilerParams(
            dimension_semantics=("parallel",),    # batch-block axis -> megacore
            vmem_limit_bytes=vmem_limit,
        ),
    )


# ----------------------------------------------------------------------------
# Public wrapper
# ----------------------------------------------------------------------------
def co_attention(H, T, W):
    """H: (B, 1, L), T: (B, S, L), W: (L, L) -> (B, L) in the promoted input dtype."""
    B, one, L = H.shape
    assert one == 1, "reshape(batch, len) in the torch code implies a singleton seq dim on H"
    S = T.shape[1]
    assert T.shape == (B, S, L) and W.shape == (L, L)

    kind = _device_kind()
    is_v7x = "7" in kind               # "TPU7x" / "TPU v7x"
    is_v5 = "v5" in kind               # no bf16 VALU/EUP on v5

    # Output dtype follows torch (promoted input dtype); accumulation stays f32.
    out_dtype = jnp.result_type(H.dtype, W.dtype, T.dtype)

    # bf16 VPU multiplies when T is bf16 and the chip has a bf16 VALU.
    mul_dtype = (jnp.bfloat16
                 if (jnp.dtype(T.dtype) == jnp.dtype(jnp.bfloat16) and not is_v5)
                 else jnp.float32)

    # Lane/sublane-aligned zero padding (inert: tanh(0)=0, zero contributions).
    Lp = _round_up(L, 128)
    s_chunk = 8 if S <= 8 else (16 if S <= 16 else 32)
    Sp = _round_up(S, s_chunk)
    n_chunks = Sp // s_chunk

    per_row = _vmem_bytes_per_batch_row(
        Sp, Lp,
        jnp.dtype(T.dtype).itemsize,
        jnp.dtype(mul_dtype).itemsize,
        jnp.dtype(out_dtype).itemsize,
        s_chunk)

    # 64 MiB/TC on v7x -> ~48 MiB budget; 128 MiB on v4/v5/v6 -> ~100 MiB budget.
    if is_v7x:
        vmem_budget = 48 << 20
    elif ("v6" in kind) or ("v5" in kind) or ("v4" in kind):
        vmem_budget = 100 << 20
    else:
        vmem_budget = 48 << 20          # unknown chip: be conservative

    TB = _choose_tb(B, per_row, vmem_budget, is_v7x)
    Bp8 = _round_up(B, 8)
    nblocks = _ceil_div(Bp8, TB)
    if is_v7x and nblocks > 1 and nblocks % 2 == 1:
        # Best effort: even block count so neither TensorCore idles on the tail.
        tb2 = _round_up(_ceil_div(Bp8, nblocks + 1), 8)
        if tb2 >= 8 and _ceil_div(Bp8, tb2) % 2 == 0:
            TB = tb2
            nblocks = _ceil_div(Bp8, TB)
    Bp = nblocks * TB

    vmem_limit = int(min(vmem_budget, max(per_row * TB + (4 << 20), 32 << 20)))

    # z1 = H @ W hoisted to a plain XLA matmul: removes W (its DMA and the MXU
    # step) from the memory-bound kernel; the extra HBM traffic (read H, write
    # z1) is negligible compared with the single pass over T.
    z1 = jnp.dot(H.reshape(B, L), W, preferred_element_type=jnp.float32)
    z1 = z1.astype(mul_dtype)
    if (Bp, Lp) != (B, L):
        z1 = jnp.pad(z1, ((0, Bp - B), (0, Lp - L)))
    Tp = T
    if (Bp, Sp, Lp) != (B, S, L):
        Tp = jnp.pad(T, ((0, Bp - B), (0, Sp - S), (0, Lp - L)))

    kernel = _make_kernel(s_chunk, n_chunks, mul_dtype)
    out = _build_call(kernel, TB, Sp, Lp, nblocks, out_dtype, vmem_limit)(z1, Tp)
    return out[:B, :L]


# ----------------------------------------------------------------------------
# Pure-JAX reference (mirrors the torch forward)
# ----------------------------------------------------------------------------
def _reference(H, T, W):
    T_perm = jnp.transpose(T, (0, 2, 1))              # (B, L, S)
    z1 = jnp.matmul(H, W)                             # (B, 1, L)
    z2 = jnp.matmul(z1, T_perm)                       # (B, 1, S)
    C = jnp.tanh(z2)
    HT = jnp.matmul(C, T)                             # (B, 1, L)
    return HT.reshape(H.shape[0], W.shape[0])


if __name__ == "__main__":
    B, S, L = 2, 8, 32                                # small shapes consistent with the module

    key = jax.random.PRNGKey(0)
    k_h, k_t, k_w = jax.random.split(key, 3)

    H = jax.random.normal(k_h, (B, 1, L), dtype=jnp.float32)
    T = jax.random.normal(k_t, (B, S, L), dtype=jnp.float32)
    # kaiming_uniform_(a=sqrt(5)) on an (L, L) weight -> bound = 1/sqrt(fan_in)
    bound = 1.0 / math.sqrt(L)
    W = jax.random.uniform(k_w, (L, L), dtype=jnp.float32,
                           minval=-bound, maxval=bound)

    out = jax.block_until_ready(co_attention(H, T, W))
    ref = _reference(H, T, W)

    assert out.shape == (B, L)
    assert out.dtype == ref.dtype
    assert jnp.allclose(out, ref, atol=2e-5, rtol=2e-5), "mismatch vs reference"

    print("KERNEL_OK")
</pallas_src>

<mosaic_0001>
module attributes {stable_mosaic.version = 11 : i64} {
  func.func @kernel(%arg0: i32, %arg1: memref<8x128xf32, #tpu.memory_space<vmem>>, %arg2: memref<8x8x128xf32, #tpu.memory_space<vmem>>, %arg3: memref<8x128xf32, #tpu.memory_space<vmem>>) attributes {dimension_semantics = [#tpu.dimension_semantics<parallel>], iteration_bounds = array<i64: 1>, scalar_prefetch = 0 : i64, scratch_operands = 0 : i64, tpu.core_type = #tpu.core_type<tc>, window_params = [{transform_indices = @transform_0, window_bounds = array<i64: 8, 128>}, {transform_indices = @transform_1, window_bounds = array<i64: 8, 8, 128>}, {transform_indices = @transform_2, window_bounds = array<i64: 8, 128>}]} {
    %c0 = arith.constant 0 : index
    %c0_0 = arith.constant 0 : index
    %0 = vector.load %arg1[%c0, %c0_0] : memref<8x128xf32, #tpu.memory_space<vmem>>, vector<8x128xf32>
    %1 = vector.shape_cast %0 : vector<8x128xf32> to vector<8x1x128xf32>
    %2 = vector.shape_cast %1 : vector<8x1x128xf32> to vector<8x1x128xf32>
    %3 = vector.broadcast %2 : vector<8x1x128xf32> to vector<8x8x128xf32>
    %cst = arith.constant 0.000000e+00 : f32
    %4 = vector.broadcast %cst : f32 to vector<8x128xf32>
    %c0_1 = arith.constant 0 : index
    %c0_2 = arith.constant 0 : index
    %c0_3 = arith.constant 0 : index
    %5 = vector.load %arg2[%c0_1, %c0_2, %c0_3] : memref<8x8x128xf32, #tpu.memory_space<vmem>>, vector<8x8x128xf32>
    %6 = arith.mulf %3, %5 : vector<8x8x128xf32>
    %cst_4 = arith.constant dense<0.000000e+00> : vector<8x8xf32>
    %7 = vector.multi_reduction <add>, %6, %cst_4 [2] : vector<8x8x128xf32> to vector<8x8xf32>
    %8 = math.tanh %7 : vector<8x8xf32>
    %9 = vector.shape_cast %8 : vector<8x8xf32> to vector<8x8x1xf32>
    %10 = vector.broadcast %9 : vector<8x8x1xf32> to vector<8x8x128xf32>
    %11 = arith.mulf %10, %5 : vector<8x8x128xf32>
    %cst_5 = arith.constant dense<0.000000e+00> : vector<8x128xf32>
    %12 = vector.multi_reduction <add>, %11, %cst_5 [1] : vector<8x8x128xf32> to vector<8x128xf32>
    %13 = arith.addf %4, %12 : vector<8x128xf32>
    %c0_6 = arith.constant 0 : index
    %c0_7 = arith.constant 0 : index
    %14 = vector.load %arg3[%c0_6, %c0_7] : memref<8x128xf32, #tpu.memory_space<vmem>>, vector<8x128xf32>
    tpu.vector_store %arg3[%c0_6, %c0_7], %13 {strides = array<i32>} : memref<8x128xf32, #tpu.memory_space<vmem>>, vector<8x128xf32>,
    return
  }
  func.func @transform_0(%arg0: i32) -> (i32, i32) {
    %c0_i32 = arith.constant 0 : i32
    %c0_i32_0 = arith.constant 0 : i32
    return %arg0, %c0_i32 : i32, i32
  }
  func.func @transform_1(%arg0: i32) -> (i32, i32, i32) {
    %c0_i32 = arith.constant 0 : i32
    %c0_i32_0 = arith.constant 0 : i32
    %c0_i32_1 = arith.constant 0 : i32
    return %arg0, %c0_i32, %c0_i32_0 : i32, i32, i32
  }
  func.func @transform_2(%arg0: i32) -> (i32, i32) {
    %c0_i32 = arith.constant 0 : i32
    %c0_i32_0 = arith.constant 0 : i32
    return %arg0, %c0_i32 : i32, i32
  }
}

</mosaic_0001>

<llo_original>
// kernel: tpu_custom_call.1
$region0: #{tpu_custom_call.1}
  #allocation0 [shape = 'u32[]', space=smem, size = 0x4, offset = 0x4, fixed_abs, tag = 'smem constant byte address 0x4 - core index']
  #allocation1 [shape = 'u32[72,128]{1,0:T(1,128)}', space=vmem, size = 0x9000, scoped, tag = 'internal scratch']
  %s0 = inlined_call_operand.hbm [shape: f32[8,128], index: 0, kind: input, shape index: {}]
  %s1 = inlined_call_operand.hbm [shape: f32[8,8,128], index: 1, kind: input, shape index: {}]
  %s2 = inlined_call_operand.hbm [shape: f32[8,128], index: 2, kind: output, shape index: {}]
  %s3 = sld [smem:[#allocation0]]
  $region26: #{tpu_custom_call.1} parent=0
    _
  %s5 = ssub.s32 1, %s3
  %s6 = scalar_select 0, %s5, %s3
  $region1: #{tpu_custom_call.1} parent=0
    #allocation2 [shape = 'u8[4096]{0}', space=vmem, size = 0x1000, scoped, tag = 'input window, operand 0, single buffered']
    #allocation3 [shape = 's32[1]{0}', space=sflag, size = 0x4, scoped, tag = 'scoped memory for tpu_custom_call.1']
    #allocation4 [shape = 's32[1]{0}', space=sflag, size = 0x4, scoped, tag = 'scoped memory for tpu_custom_call.1']
    #allocation5 [shape = 'u8[32768]{0}', space=vmem, size = 0x8000, scoped, tag = 'input window, operand 1, single buffered']
    #allocation6 [shape = 's32[1]{0}', space=sflag, size = 0x4, scoped, tag = 'scoped memory for tpu_custom_call.1']
    #allocation7 [shape = 'u8[4096]{0}', space=vmem, size = 0x1000, scoped, tag = 'output window, operand 0, single buffered']
    %7 = vsyncpa [#allocation3], 0
    %8 = vsyncpa [#allocation6], 0
    %9 = vsyncpa [#allocation4], 0
    // Predicated region
    $region2: #{tpu_custom_call.1} parent=1 // pred_check
      _
    $region3: #{tpu_custom_call.1} parent=1 // pred_check_branch
      %11 = sbr.rel (0) target = $region5
    $region4: #{tpu_custom_call.1} parent=1 // pred_region
      %13 = vsyncadd [#allocation3], 0
      %s15 = sshll.u32 %s0, 4
      %s16 = int_to_ptr.hbm [resolvable:$true] %s15
      %s17 = sshll.u32 [#allocation2], 4
      %s18 = int_to_ptr.vmem [resolvable:$true] %s17
      %20 = dma.hbm_to_vmem [thread:$0]  %s16, 128, %s18, [#allocation3]
    $region5: #{tpu_custom_call.1} parent=1 // pred_fallthru
      _
    // Predicated region
    $region6: #{tpu_custom_call.1} parent=1 // pred_check
      _
    $region7: #{tpu_custom_call.1} parent=1 // pred_check_branch
      %22 = sbr.rel (0) target = $region9
    $region8: #{tpu_custom_call.1} parent=1 // pred_region
      %24 = vsyncadd [#allocation6], 0
      %s25 = sshll.u32 %s1, 4
      %s26 = int_to_ptr.hbm [resolvable:$true] %s25
      %s27 = sshll.u32 [#allocation5], 4
      %s28 = int_to_ptr.vmem [resolvable:$true] %s27
      %33 = dma.hbm_to_vmem [thread:$0]  %s26, 1024, %s28, [#allocation6], 128, 128, 8
    $region9: #{tpu_custom_call.1} parent=1 // pred_fallthru
      _
    // Predicated region
    $region10: #{tpu_custom_call.1} parent=1 // pred_check
      _
    $region11: #{tpu_custom_call.1} parent=1 // pred_check_branch
      %35 = sbr.rel (0) target = $region13
    $region12: #{tpu_custom_call.1} parent=1 // pred_region
      %37 = dma.done [#allocation3], 128
    $region13: #{tpu_custom_call.1} parent=1 // pred_fallthru
      _
    // Predicated region
    $region14: #{tpu_custom_call.1} parent=1 // pred_check
      _
    $region15: #{tpu_custom_call.1} parent=1 // pred_check_branch
      %39 = sbr.rel (0) target = $region17
    $region16: #{tpu_custom_call.1} parent=1 // pred_region
      %41 = dma.done [#allocation6], 1024
    $region17: #{tpu_custom_call.1} parent=1 // pred_fallthru
      _
    %v42 = vld [vmem:[#allocation2] sm:$0xff]
    %v44 = vrot.slane %v42, 1
    %v45 = vrot.slane %v42, 2
    %v46 = vrot.slane %v42, 3
    %v47 = vrot.slane %v42, 4
    %v48 = vrot.slane %v42, 5
    %v49 = vrot.slane %v42, 6
    %v50 = vrot.slane %v42, 7
    %v51 = vperm.slane %v42, 0
    %v52 = vperm.slane %v44, 0
    %v53 = vperm.slane %v45, 0
    %v54 = vperm.slane %v46, 0
    %v55 = vperm.slane %v47, 0
    %v56 = vperm.slane %v48, 0
    %v57 = vperm.slane %v49, 0
    %v58 = vperm.slane %v50, 0
    %v67 = vld [vmem:[#allocation5] sm:$0xff]
    %v68 = vld [vmem:[#allocation5 + $0x8] sm:$0xff]
    %v69 = vld [vmem:[#allocation5 + $0x10] sm:$0xff]
    %v70 = vld [vmem:[#allocation5 + $0x18] sm:$0xff]
    %v71 = vld [vmem:[#allocation5 + $0x20] sm:$0xff]
    %v72 = vld [vmem:[#allocation5 + $0x28] sm:$0xff]
    %v73 = vld [vmem:[#allocation5 + $0x30] sm:$0xff]
    %v74 = vld [vmem:[#allocation5 + $0x38] sm:$0xff]
    %v75 = vmul.f32 %v51, %v67
    %v76 = vmul.f32 %v52, %v68
    %v77 = vmul.f32 %v53, %v69
    %v78 = vmul.f32 %v54, %v70
    %v79 = vmul.f32 %v55, %v71
    %v80 = vmul.f32 %v56, %v72
    %v81 = vmul.f32 %v57, %v73
    %v82 = vmul.f32 %v58, %v74
    %83 = vadd.xlane.f32.xlu0 %v75
    %v84 = vpop.xlane.xlu0 %83
    %85 = vadd.xlane.f32.xlu0 %v76
    %v86 = vpop.xlane.xlu0 %85
    %87 = vadd.xlane.f32.xlu0 %v77
    %v88 = vpop.xlane.xlu0 %87
    %89 = vadd.xlane.f32.xlu0 %v78
    %v90 = vpop.xlane.xlu0 %89
    %91 = vadd.xlane.f32.xlu0 %v79
    %v92 = vpop.xlane.xlu0 %91
    %93 = vadd.xlane.f32.xlu0 %v80
    %v94 = vpop.xlane.xlu0 %93
    %95 = vadd.xlane.f32.xlu0 %v81
    %v96 = vpop.xlane.xlu0 %95
    %97 = vadd.xlane.f32.xlu0 %v82
    %v98 = vpop.xlane.xlu0 %97
    %v99 = vtanh.pop %v84
    %v100 = vtanh.pop %v86
    %v101 = vtanh.pop %v88
    %v102 = vtanh.pop %v90
    %v103 = vtanh.pop %v92
    %v104 = vtanh.pop %v94
    %v105 = vtanh.pop %v96
    %v106 = vtanh.pop %v98
    %v107 = vmul.f32 %v99, %v67
    %v108 = vmul.f32 %v100, %v68
    %v109 = vmul.f32 %v101, %v69
    %v110 = vmul.f32 %v102, %v70
    %v111 = vmul.f32 %v103, %v71
    %v112 = vmul.f32 %v104, %v72
    %v113 = vmul.f32 %v105, %v73
    %v114 = vmul.f32 %v106, %v74
    %v115 = vrot.slane %v107, 4
    %v116 = vadd.f32 %v107, %v115
    %v117 = vrot.slane %v116, 2
    %v118 = vadd.f32 %v116, %v117
    %v119 = vrot.slane %v118, 1
    %v120 = vadd.f32 %v118, %v119
    %v121 = vrot.slane %v108, 4
    %v122 = vadd.f32 %v108, %v121
    %v123 = vrot.slane %v122, 2
    %v124 = vadd.f32 %v122, %v123
    %v125 = vrot.slane %v124, 1
    %v126 = vadd.f32 %v124, %v125
    %v127 = vrot.slane %v109, 4
    %v128 = vadd.f32 %v109, %v127
    %v129 = vrot.slane %v128, 2
    %v130 = vadd.f32 %v128, %v129
    %v131 = vrot.slane %v130, 1
    %v132 = vadd.f32 %v130, %v131
    %v133 = vrot.slane %v110, 4
    %v134 = vadd.f32 %v110, %v133
    %v135 = vrot.slane %v134, 2
    %v136 = vadd.f32 %v134, %v135
    %v137 = vrot.slane %v136, 1
    %v138 = vadd.f32 %v136, %v137
    %v139 = vrot.slane %v111, 4
    %v140 = vadd.f32 %v111, %v139
    %v141 = vrot.slane %v140, 2
    %v142 = vadd.f32 %v140, %v141
    %v143 = vrot.slane %v142, 1
    %v144 = vadd.f32 %v142, %v143
    %v145 = vrot.slane %v112, 4
    %v146 = vadd.f32 %v112, %v145
    %v147 = vrot.slane %v146, 2
    %v148 = vadd.f32 %v146, %v147
    %v149 = vrot.slane %v148, 1
    %v150 = vadd.f32 %v148, %v149
    %v151 = vrot.slane %v113, 4
    %v152 = vadd.f32 %v113, %v151
    %v153 = vrot.slane %v152, 2
    %v154 = vadd.f32 %v152, %v153
    %v155 = vrot.slane %v154, 1
    %v156 = vadd.f32 %v154, %v155
    %v157 = vrot.slane %v114, 4
    %v158 = vadd.f32 %v114, %v157
    %v159 = vrot.slane %v158, 2
    %v160 = vadd.f32 %v158, %v159
    %v161 = vrot.slane %v160, 1
    %v162 = vadd.f32 %v160, %v161
    %v163 = vadd.f32 %v120, 0.0
    %v164 = vadd.f32 %v126, 0.0
    %v165 = vadd.f32 %v132, 0.0
    %v166 = vadd.f32 %v138, 0.0
    %v167 = vadd.f32 %v144, 0.0
    %v168 = vadd.f32 %v150, 0.0
    %v169 = vadd.f32 %v156, 0.0
    %v170 = vadd.f32 %v162, 0.0
    %vm179 = vcmask 1041409
    %v180 = vsel %vm179, %v164, %v163
    %vm181 = vcmask 1042434
    %v182 = vsel %vm181, %v165, %v180
    %vm183 = vcmask 1043459
    %v184 = vsel %vm183, %v166, %v182
    %vm185 = vcmask 1044484
    %v186 = vsel %vm185, %v167, %v184
    %vm187 = vcmask 1045509
    %v188 = vsel %vm187, %v168, %v186
    %vm189 = vcmask 1046534
    %v190 = vsel %vm189, %v169, %v188
    %vm191 = vcmask 1047559
    %v192 = vsel %vm191, %v170, %v190
    %194 = vst [vmem:[#allocation7] sm:$0xff] %v192
    // Predicated region
    $region18: #{tpu_custom_call.1} parent=1 // pred_check
      _
    $region19: #{tpu_custom_call.1} parent=1 // pred_check_branch
      %196 = sbr.rel (0) target = $region21
    $region20: #{tpu_custom_call.1} parent=1 // pred_region
      %198 = vsyncadd [#allocation4], 0
      %s200 = sshll.u32 [#allocation7], 4
      %s201 = int_to_ptr.vmem [resolvable:$true] %s200
      %s202 = sshll.u32 %s2, 4
      %s203 = int_to_ptr.hbm [resolvable:$true] %s202
      %205 = dma.vmem_to_hbm [thread:$0]  %s201, 128, %s203, [#allocation4]
    $region21: #{tpu_custom_call.1} parent=1 // pred_fallthru
      _
    // Predicated region
    $region22: #{tpu_custom_call.1} parent=1 // pred_check
      _
    $region23: #{tpu_custom_call.1} parent=1 // pred_check_branch
      %207 = sbr.rel (0) target = $region25
    $region24: #{tpu_custom_call.1} parent=1 // pred_region
      %209 = dma.done [#allocation4], 128
    $region25: #{tpu_custom_call.1} parent=1 // pred_fallthru
      _
    %210 = vsyncpa [#allocation3], 1
    %211 = vsyncpa [#allocation6], 1
    %212 = vsyncpa [#allocation4], 1

</llo_original>
